<compile_context>
chip_gen: v5e
topology: v5e:2x2
jax: 0.10.0
libtpu: 0.0.40
codegen_flags: <defaults>
</compile_context>

<pallas_src>
import math
import jax
import jax.numpy as jnp
from jax.experimental import pallas as pl
from jax.experimental.pallas import tpu as pltpu


_INV_SQRT2 = 1.0 / math.sqrt(2.0)
_VMEM_HEADROOM = 16 * 1024 * 1024   # leave for compiler-internal scratch
_FIXED_SLACK = 2 * 1024 * 1024      # slack added to the exact buffer sum


def _round_up(v, m):
    return (v + m - 1) // m * m


def _gelu_exact(h):
    # Exact GELU (matches torch.nn.GELU default): 0.5*x*(1+erf(x/sqrt(2))).
    # TODO(synk): switch to tanh-approx GELU (EUP slot) if erf parity is not
    # required AND the bundle dump shows VALU as the binding slot (v7x case).
    return 0.5 * h * (1.0 + jax.lax.erf(h * _INV_SQRT2))


# --------------------------------------------------------------------------- #
# Kernels
# --------------------------------------------------------------------------- #
def mlp_kernel_resident(x_ref, w1_ref, b1_ref, w2_ref, b2_ref, o_ref):
    # x_ref  : (TM, C_in)    current row-tile of tokens (native dtype)
    # w1_ref : (C_in, H)     fc1 weight, pre-transposed, resident
    # b1_ref : (1, H)        fc1 bias
    # w2_ref : (H, C_out)    fc2 weight, pre-transposed, resident
    # b2_ref : (1, C_out)    fc2 bias
    # o_ref  : (TM, C_out)
    h = jnp.dot(x_ref[...], w1_ref[...], preferred_element_type=jnp.float32)
    h = _gelu_exact(h + b1_ref[...].astype(jnp.float32))
    # dropout p=0.0 -> identity
    y = jnp.dot(h.astype(w2_ref.dtype), w2_ref[...],
                preferred_element_type=jnp.float32)
    o_ref[...] = (y + b2_ref[...].astype(jnp.float32)).astype(o_ref.dtype)


def mlp_kernel_htiled(x_ref, w1_ref, b1_ref, w2_ref, b2_ref, o_ref, acc_ref):
    # Grid: (rows "parallel", hidden-dim "arbitrary" reduction, innermost).
    # Each H-slice of fc1 contracts over the full C_in, so per-slice
    # GELU -> partial fc2 accumulation is exact.
    k = pl.program_id(1)

    @pl.when(k == 0)
    def _():
        acc_ref[...] = jnp.zeros_like(acc_ref)

    h = jnp.dot(x_ref[...], w1_ref[...], preferred_element_type=jnp.float32)
    h = _gelu_exact(h + b1_ref[...].astype(jnp.float32))
    acc_ref[...] += jnp.dot(h.astype(w2_ref.dtype), w2_ref[...],
                            preferred_element_type=jnp.float32)

    @pl.when(k == pl.num_programs(1) - 1)
    def _():
        o_ref[...] = (acc_ref[...]
                      + b2_ref[...].astype(jnp.float32)).astype(o_ref.dtype)


# --------------------------------------------------------------------------- #
# Wrapper helpers
# --------------------------------------------------------------------------- #
def _const_spec(shape, index_map):
    """BlockSpec for operands whose block index never changes across the grid:
    single-buffered so resident weights are not copied twice into VMEM."""
    try:
        return pl.BlockSpec(shape, index_map, pipeline_mode=pl.Buffered(buffer_count=1))
    except TypeError:   # older jax without pipeline_mode -> default buffering
        return pl.BlockSpec(shape, index_map)


def _vmem_capacity_bytes():
    try:
        cap = getattr(pltpu.get_tpu_info(), "vmem_capacity_bytes", None)
        if cap:
            return int(cap)
    except Exception:
        pass
    return 64 * 1024 * 1024   # conservative (v7x-sized) fallback


def _multi_tensorcore_chip():
    """True on chips whose "parallel" grid axes shard across >1 TensorCore."""
    try:
        kind = jax.devices()[0].device_kind.lower()
    except Exception:
        return False
    return any(t in kind for t in ("v4", "v5p", "v7", "7x"))


def _resident_bytes(tm, c_in, h, c_out, in_sz, w_sz, out_sz):
    """Exact VMEM accounting for the resident-weights kernel."""
    return (2 * tm * c_in * in_sz          # x row tile (double-buffered)
            + 2 * tm * c_out * out_sz      # out row tile (double-buffered)
            + c_in * h * w_sz              # W1^T (single-buffered, resident)
            + h * c_out * w_sz             # W2^T (single-buffered, resident)
            + 8 * (h + c_out) * w_sz       # biases (sublane-padded rows)
            + tm * h * 4                   # f32 GELU intermediate
            + tm * c_out * 4)              # f32 fc2 result


def _htiled_bytes(tm, th, c_in, c_out, in_sz, w_sz, out_sz):
    """Exact VMEM accounting for the H-tiled (reduction) kernel."""
    return (2 * tm * c_in * in_sz          # x row tile
            + 2 * tm * c_out * out_sz      # out row tile
            + 2 * c_in * th * w_sz         # W1^T tile (double-buffered)
            + 2 * th * c_out * w_sz        # W2^T tile (double-buffered)
            + 2 * 8 * th * w_sz            # b1 tile
            + 8 * c_out * w_sz             # b2 (resident)
            + tm * th * 4                  # f32 GELU intermediate
            + tm * c_out * 4)              # f32 accumulator scratch


# --------------------------------------------------------------------------- #
# Forward
# --------------------------------------------------------------------------- #
def mlp_forward(x, w1, b1, w2, b2, *, tile_m=None, compute_dtype=None,
                force_h_tiling=False, h_tile=None):
    """x: (B, N, C_in) -> (B, N, C_out).  Weights in PyTorch nn.Linear layout.

    tile_m:        row tile (None -> auto: largest of 512/256/128/64 that fits)
    compute_dtype: e.g. jnp.bfloat16 to cast MXU feeds (accumulation stays f32)
    force_h_tiling / h_tile: testing hooks for the H-tiled reduction path
    """
    B, N, C_in = x.shape
    H, _ = w1.shape
    C_out, _ = w2.shape
    M = B * N

    if compute_dtype is not None:
        x = x.astype(compute_dtype)
        w1 = w1.astype(compute_dtype)
        w2 = w2.astype(compute_dtype)

    in_sz = jnp.dtype(x.dtype).itemsize
    w_sz = jnp.dtype(w1.dtype).itemsize
    out_sz = in_sz
    out_dtype = x.dtype

    # --- lane-dense channel padding (multiples of 128) -----------------------
    C_in_p = _round_up(C_in, 128)
    H_p = _round_up(H, 128)
    C_out_p = _round_up(C_out, 128)

    # --- generation-aware VMEM budget ----------------------------------------
    capacity = _vmem_capacity_bytes()
    budget = capacity - _VMEM_HEADROOM

    M8 = _round_up(M, 8)

    # --- row tile selection + resident-vs-H-tiled dispatch --------------------
    tm_candidates = ([512, 256, 128, 64] if tile_m is None
                     else [max(_round_up(tile_m, 8), 8)])
    tm = None
    use_h_tiling = bool(force_h_tiling)
    if not use_h_tiling:
        for cand in tm_candidates:
            t = min(cand, M8)
            if (_resident_bytes(t, C_in_p, H_p, C_out_p, in_sz, w_sz, out_sz)
                    + _FIXED_SLACK <= budget):
                tm = t
                break
        if tm is None:
            use_h_tiling = True

    if use_h_tiling:
        # Resident weights don't fit this chip's VMEM: reduce over H tiles.
        tm = min(max(_round_up(tile_m or 256, 8), 8), M8)
        if h_tile is not None:
            th = _round_up(h_tile, 128)
        else:
            th = 128
            for cand in (2048, 1024, 512, 256, 128):
                if (_htiled_bytes(tm, cand, C_in_p, C_out_p, in_sz, w_sz, out_sz)
                        + _FIXED_SLACK <= budget):
                    th = cand
                    break
        H_p = _round_up(H, th)
        grid_h = H_p // th
        need = _htiled_bytes(tm, th, C_in_p, C_out_p, in_sz, w_sz, out_sz)
    else:
        th = H_p
        grid_h = 1
        need = _resident_bytes(tm, C_in_p, H_p, C_out_p, in_sz, w_sz, out_sz)

    M_p = _round_up(M8, tm)
    grid_m = M_p // tm
    # Even split of the "parallel" row axis across multi-TensorCore chips
    # (v4 / v5p / v7x): avoids one core idling for a step on odd grids.
    if _multi_tensorcore_chip() and grid_m > 1 and grid_m % 2 == 1:
        grid_m += 1
        M_p += tm

    vmem_limit = int(min(max(need + 4 * 1024 * 1024, 32 * 1024 * 1024),
                         capacity - 8 * 1024 * 1024))

    # --- pad / pre-transpose operands once at trace time ----------------------
    x2d = jnp.pad(x.reshape(M, C_in), ((0, M_p - M), (0, C_in_p - C_in)))
    w1_t = jnp.pad(w1.T, ((0, C_in_p - C_in), (0, H_p - H)))       # (C_in_p, H_p)
    w2_t = jnp.pad(w2.T, ((0, H_p - H), (0, C_out_p - C_out)))     # (H_p, C_out_p)
    b1_p = jnp.pad(b1, (0, H_p - H)).reshape(1, H_p)
    b2_p = jnp.pad(b2, (0, C_out_p - C_out)).reshape(1, C_out_p)

    cost = pl.CostEstimate(
        flops=2 * M_p * (C_in_p * H_p + H_p * C_out_p),
        transcendentals=M_p * H_p,
        bytes_accessed=(M_p * C_in_p * in_sz + M_p * C_out_p * out_sz
                        + (C_in_p * H_p + H_p * C_out_p) * w_sz
                        + (H_p + C_out_p) * jnp.dtype(b1.dtype).itemsize),
    )

    if not use_h_tiling:
        out2d = pl.pallas_call(
            mlp_kernel_resident,
            out_shape=jax.ShapeDtypeStruct((M_p, C_out_p), out_dtype),
            grid_spec=pltpu.PrefetchScalarGridSpec(
                num_scalar_prefetch=0,
                grid=(grid_m,),
                in_specs=[
                    pl.BlockSpec((tm, C_in_p),    lambda i: (i, 0)),   # x tile
                    _const_spec((C_in_p, H_p),    lambda i: (0, 0)),   # W1^T
                    _const_spec((1, H_p),         lambda i: (0, 0)),   # b1
                    _const_spec((H_p, C_out_p),   lambda i: (0, 0)),   # W2^T
                    _const_spec((1, C_out_p),     lambda i: (0, 0)),   # b2
                ],
                out_specs=pl.BlockSpec((tm, C_out_p), lambda i: (i, 0)),
            ),
            compiler_params=pltpu.CompilerParams(
                dimension_semantics=("parallel",),
                vmem_limit_bytes=vmem_limit),
            cost_estimate=cost,
        )(x2d, w1_t, b1_p, w2_t, b2_p)
    else:
        out2d = pl.pallas_call(
            mlp_kernel_htiled,
            out_shape=jax.ShapeDtypeStruct((M_p, C_out_p), out_dtype),
            grid_spec=pltpu.PrefetchScalarGridSpec(
                num_scalar_prefetch=0,
                grid=(grid_m, grid_h),
                in_specs=[
                    pl.BlockSpec((tm, C_in_p),  lambda i, k: (i, 0)),   # x tile
                    pl.BlockSpec((C_in_p, th),  lambda i, k: (0, k)),   # W1^T tile
                    pl.BlockSpec((1, th),       lambda i, k: (0, k)),   # b1 tile
                    pl.BlockSpec((th, C_out_p), lambda i, k: (k, 0)),   # W2^T tile
                    _const_spec((1, C_out_p),   lambda i, k: (0, 0)),   # b2
                ],
                out_specs=pl.BlockSpec((tm, C_out_p), lambda i, k: (i, 0)),
                scratch_shapes=[pltpu.VMEM((tm, C_out_p), jnp.float32)],
            ),
            compiler_params=pltpu.CompilerParams(
                dimension_semantics=("parallel", "arbitrary"),
                vmem_limit_bytes=vmem_limit),
            cost_estimate=cost,
        )(x2d, w1_t, b1_p, w2_t, b2_p)

    return out2d[:M, :C_out].reshape(B, N, C_out)


# --------------------------------------------------------------------------- #
# Reference / init / tests
# --------------------------------------------------------------------------- #
def init_mlp_params(key, in_features, hidden_features, out_features,
                    dtype=jnp.float32):
    """Deterministic init matching nn.Linear shapes."""
    k1, k2, k3, k4 = jax.random.split(key, 4)
    lim1 = 1.0 / math.sqrt(in_features)
    lim2 = 1.0 / math.sqrt(hidden_features)
    w1 = jax.random.uniform(k1, (hidden_features, in_features), dtype,
                            minval=-lim1, maxval=lim1)
    b1 = jax.random.uniform(k2, (hidden_features,), dtype,
                            minval=-lim1, maxval=lim1)
    w2 = jax.random.uniform(k3, (out_features, hidden_features), dtype,
                            minval=-lim2, maxval=lim2)
    b2 = jax.random.uniform(k4, (out_features,), dtype,
                            minval=-lim2, maxval=lim2)
    return w1, b1, w2, b2


def _reference(x, w1, b1, w2, b2):
    h = x @ w1.T + b1
    h = 0.5 * h * (1.0 + jax.lax.erf(h / math.sqrt(2.0)))
    return h @ w2.T + b2


if __name__ == "__main__":
    key = jax.random.PRNGKey(0)

    # ---- Test 1: small ViT-style toy shape (channels not 128-aligned) ------
    kx, kp, key = jax.random.split(key, 3)
    B, N, C_in, hidden = 2, 8, 32, 64
    C_out = C_in
    x = jax.random.normal(kx, (B, N, C_in), dtype=jnp.float32)
    w1, b1, w2, b2 = init_mlp_params(kp, C_in, hidden, C_out)

    out = jax.block_until_ready(mlp_forward(x, w1, b1, w2, b2))
    y_ref = _reference(x, w1, b1, w2, b2)
    assert jnp.allclose(out, y_ref, atol=1e-5, rtol=1e-5), "mismatch (test 1)"

    # ---- Test 2: ragged token count + multiple grid steps (resident path) ---
    kx2, kp2, key = jax.random.split(key, 3)
    B2, N2, C2, H2 = 2, 200, 96, 192          # M=400 (ragged), channels unaligned
    x2 = jax.random.normal(kx2, (B2, N2, C2), dtype=jnp.float32)
    p2 = init_mlp_params(kp2, C2, H2, C2)

    out2 = jax.block_until_ready(mlp_forward(x2, *p2, tile_m=128))
    y2_ref = _reference(x2, *p2)
    assert jnp.allclose(out2, y2_ref, atol=1e-4, rtol=1e-4), "mismatch (test 2)"

    # ---- Test 3: force the H-tiled reduction path (large-H fallback) --------
    kx3, kp3, key = jax.random.split(key, 3)
    B3, N3, C3, H3 = 2, 100, 64, 320          # H pads to 384 -> 3 reduction steps
    x3 = jax.random.normal(kx3, (B3, N3, C3), dtype=jnp.float32)
    p3 = init_mlp_params(kp3, C3, H3, C3)

    out3 = jax.block_until_ready(
        mlp_forward(x3, *p3, tile_m=128, force_h_tiling=True, h_tile=128))
    y3_ref = _reference(x3, *p3)
    assert jnp.allclose(out3, y3_ref, atol=1e-4, rtol=1e-4), "mismatch (test 3)"

    # ---- Test 4: bf16 MXU feeds (f32 accumulation), loose tolerance ---------
    x2_bf = x2.astype(jnp.bfloat16).astype(jnp.float32)
    p2_bf = tuple(p.astype(jnp.bfloat16).astype(jnp.float32) for p in p2)
    out4 = jax.block_until_ready(
        mlp_forward(x2, *p2, tile_m=128, compute_dtype=jnp.bfloat16))
    y4_ref = _reference(x2_bf, *p2_bf)
    assert jnp.allclose(out4.astype(jnp.float32), y4_ref,
                        atol=5e-2, rtol=5e-2), "mismatch (test 4, bf16)"

    print("KERNEL_OK")
</pallas_src>

<mosaic_0001>
module attributes {stable_mosaic.version = 11 : i64} {
  func.func @mlp_kernel_resident(%arg0: i32, %arg1: memref<16x128xf32, #tpu.memory_space<vmem>>, %arg2: memref<128x128xf32, #tpu.memory_space<vmem>>, %arg3: memref<1x128xf32, #tpu.memory_space<vmem>>, %arg4: memref<128x128xf32, #tpu.memory_space<vmem>>, %arg5: memref<1x128xf32, #tpu.memory_space<vmem>>, %arg6: memref<16x128xf32, #tpu.memory_space<vmem>>) attributes {dimension_semantics = [#tpu.dimension_semantics<parallel>], iteration_bounds = array<i64: 1>, scalar_prefetch = 0 : i64, scratch_operands = 0 : i64, tpu.core_type = #tpu.core_type<tc>, window_params = [{transform_indices = @transform_0, window_bounds = array<i64: 16, 128>}, {pipeline_mode = #tpu.pipeline_mode<synchronous>, transform_indices = @transform_1, window_bounds = array<i64: 128, 128>}, {pipeline_mode = #tpu.pipeline_mode<synchronous>, transform_indices = @transform_2, window_bounds = array<i64: 1, 128>}, {pipeline_mode = #tpu.pipeline_mode<synchronous>, transform_indices = @transform_3, window_bounds = array<i64: 128, 128>}, {pipeline_mode = #tpu.pipeline_mode<synchronous>, transform_indices = @transform_4, window_bounds = array<i64: 1, 128>}, {transform_indices = @transform_5, window_bounds = array<i64: 16, 128>}]} {
    %c0 = arith.constant 0 : index
    %c0_0 = arith.constant 0 : index
    %0 = vector.load %arg1[%c0, %c0_0] : memref<16x128xf32, #tpu.memory_space<vmem>>, vector<16x128xf32>
    %c0_1 = arith.constant 0 : index
    %c0_2 = arith.constant 0 : index
    %1 = vector.load %arg2[%c0_1, %c0_2] : memref<128x128xf32, #tpu.memory_space<vmem>>, vector<128x128xf32>
    %cst = arith.constant dense<0.000000e+00> : vector<16x128xf32>
    %2 = tpu.matmul %0, %1, %cst {dimension_numbers = #tpu.dot_dimension_numbers<[1], [0], [0], [1], [0, 0, 1, 1], [], []>} : vector<16x128xf32>, vector<128x128xf32>, vector<16x128xf32> -> vector<16x128xf32>
    %c0_3 = arith.constant 0 : index
    %c0_4 = arith.constant 0 : index
    %3 = vector.load %arg3[%c0_3, %c0_4] : memref<1x128xf32, #tpu.memory_space<vmem>>, vector<1x128xf32>
    %4 = vector.broadcast %3 : vector<1x128xf32> to vector<16x128xf32>
    %5 = arith.addf %2, %4 : vector<16x128xf32>
    %cst_5 = arith.constant 5.000000e-01 : f32
    %6 = vector.broadcast %cst_5 : f32 to vector<16x128xf32>
    %7 = arith.mulf %6, %5 : vector<16x128xf32>
    %cst_6 = arith.constant 0.707106769 : f32
    %8 = vector.broadcast %cst_6 : f32 to vector<16x128xf32>
    %9 = arith.mulf %5, %8 : vector<16x128xf32>
    %10 = math.erf %9 : vector<16x128xf32>
    %cst_7 = arith.constant 1.000000e+00 : f32
    %11 = vector.broadcast %cst_7 : f32 to vector<16x128xf32>
    %12 = arith.addf %11, %10 : vector<16x128xf32>
    %13 = arith.mulf %7, %12 : vector<16x128xf32>
    %c0_8 = arith.constant 0 : index
    %c0_9 = arith.constant 0 : index
    %14 = vector.load %arg4[%c0_8, %c0_9] : memref<128x128xf32, #tpu.memory_space<vmem>>, vector<128x128xf32>
    %cst_10 = arith.constant dense<0.000000e+00> : vector<16x128xf32>
    %15 = tpu.matmul %13, %14, %cst_10 {dimension_numbers = #tpu.dot_dimension_numbers<[1], [0], [0], [1], [0, 0, 1, 1], [], []>} : vector<16x128xf32>, vector<128x128xf32>, vector<16x128xf32> -> vector<16x128xf32>
    %c0_11 = arith.constant 0 : index
    %c0_12 = arith.constant 0 : index
    %16 = vector.load %arg5[%c0_11, %c0_12] : memref<1x128xf32, #tpu.memory_space<vmem>>, vector<1x128xf32>
    %17 = vector.broadcast %16 : vector<1x128xf32> to vector<16x128xf32>
    %18 = arith.addf %15, %17 : vector<16x128xf32>
    %c0_13 = arith.constant 0 : index
    %c0_14 = arith.constant 0 : index
    %19 = vector.load %arg6[%c0_13, %c0_14] : memref<16x128xf32, #tpu.memory_space<vmem>>, vector<16x128xf32>
    tpu.vector_store %arg6[%c0_13, %c0_14], %18 {strides = array<i32>} : memref<16x128xf32, #tpu.memory_space<vmem>>, vector<16x128xf32>,
    return
  }
  func.func @transform_0(%arg0: i32) -> (i32, i32) {
    %c0_i32 = arith.constant 0 : i32
    %c0_i32_0 = arith.constant 0 : i32
    return %arg0, %c0_i32 : i32, i32
  }
  func.func @transform_1(%arg0: i32) -> (i32, i32) {
    %c0_i32 = arith.constant 0 : i32
    %c0_i32_0 = arith.constant 0 : i32
    %c0_i32_1 = arith.constant 0 : i32
    return %c0_i32, %c0_i32_0 : i32, i32
  }
  func.func @transform_2(%arg0: i32) -> (i32, i32) {
    %c0_i32 = arith.constant 0 : i32
    %c0_i32_0 = arith.constant 0 : i32
    %c0_i32_1 = arith.constant 0 : i32
    return %c0_i32, %c0_i32_0 : i32, i32
  }
  func.func @transform_3(%arg0: i32) -> (i32, i32) {
    %c0_i32 = arith.constant 0 : i32
    %c0_i32_0 = arith.constant 0 : i32
    %c0_i32_1 = arith.constant 0 : i32
    return %c0_i32, %c0_i32_0 : i32, i32
  }
  func.func @transform_4(%arg0: i32) -> (i32, i32) {
    %c0_i32 = arith.constant 0 : i32
    %c0_i32_0 = arith.constant 0 : i32
    %c0_i32_1 = arith.constant 0 : i32
    return %c0_i32, %c0_i32_0 : i32, i32
  }
  func.func @transform_5(%arg0: i32) -> (i32, i32) {
    %c0_i32 = arith.constant 0 : i32
    %c0_i32_0 = arith.constant 0 : i32
    return %arg0, %c0_i32 : i32, i32
  }
}

</mosaic_0001>

<llo_original>
// kernel: tpu_custom_call.1
$region0: #{tpu_custom_call.1}
  #allocation0 [shape = 'u32[]', space=smem, size = 0x4, offset = 0x4, fixed_abs, tag = 'smem constant byte address 0x4 - core index']
  #allocation1 [shape = 'u32[72,128]{1,0:T(1,128)}', space=vmem, size = 0x9000, scoped, tag = 'internal scratch']
  %s0 = inlined_call_operand.hbm [shape: f32[16,128], index: 0, kind: input, shape index: {}]
  %s1 = inlined_call_operand.hbm [shape: f32[128,128], index: 1, kind: input, shape index: {}]
  %s2 = inlined_call_operand.vmem [shape: f32[1,128], index: 2, kind: input, shape index: {}]
  %s3 = inlined_call_operand.hbm [shape: f32[128,128], index: 3, kind: input, shape index: {}]
  %s4 = inlined_call_operand.vmem [shape: f32[1,128], index: 4, kind: input, shape index: {}]
  %s5 = inlined_call_operand.hbm [shape: f32[16,128], index: 5, kind: output, shape index: {}]
  %s6 = sld [smem:[#allocation0]]
  $region42: #{tpu_custom_call.1} parent=0
    _
  %s8 = ssub.s32 1, %s6
  %s9 = scalar_select 0, %s8, %s6
  $region1: #{tpu_custom_call.1} parent=0
    #allocation2 [shape = 'u8[8192]{0}', space=vmem, size = 0x2000, scoped, tag = 'input window, operand 0, single buffered']
    #allocation3 [shape = 's32[1]{0}', space=sflag, size = 0x4, scoped, tag = 'scoped memory for tpu_custom_call.1']
    #allocation4 [shape = 's32[1]{0}', space=sflag, size = 0x4, scoped, tag = 'scoped memory for tpu_custom_call.1']
    #allocation5 [shape = 'u8[65536]{0}', space=vmem, size = 0x10000, scoped, tag = 'input window, operand 1, single buffered']
    #allocation6 [shape = 's32[1]{0}', space=sflag, size = 0x4, scoped, tag = 'scoped memory for tpu_custom_call.1']
    #allocation7 [shape = 'u8[65536]{0}', space=vmem, size = 0x10000, scoped, tag = 'input window, operand 3, single buffered']
    #allocation8 [shape = 'u8[8192]{0}', space=vmem, size = 0x2000, scoped, tag = 'output window, operand 0, single buffered']
    %10 = vsyncpa [#allocation3], 0
    %11 = vsyncpa [#allocation6], 0
    %12 = vsyncpa [#allocation4], 0
    // Predicated region
    $region2: #{tpu_custom_call.1} parent=1 // pred_check
      _
    $region3: #{tpu_custom_call.1} parent=1 // pred_check_branch
      %14 = sbr.rel (0) target = $region5
    $region4: #{tpu_custom_call.1} parent=1 // pred_region
      %16 = vsyncadd [#allocation3], 0
      %s17 = sshll.u32 %s0, 4
      %s18 = int_to_ptr.hbm [resolvable:$true] %s17
      %s19 = sshll.u32 [#allocation2], 4
      %s20 = int_to_ptr.vmem [resolvable:$true] %s19
      %25 = dma.hbm_to_vmem [thread:$0]  %s18, 256, %s20, [#allocation3], 128, 128, 8
    $region5: #{tpu_custom_call.1} parent=1 // pred_fallthru
      _
    // Predicated region
    $region6: #{tpu_custom_call.1} parent=1 // pred_check
      _
    $region7: #{tpu_custom_call.1} parent=1 // pred_check_branch
      %27 = sbr.rel (0) target = $region9
    $region8: #{tpu_custom_call.1} parent=1 // pred_region
      %29 = vsyncadd [#allocation6], 0
      %s30 = sshll.u32 %s1, 4
      %s31 = int_to_ptr.hbm [resolvable:$true] %s30
      %s32 = sshll.u32 [#allocation5], 4
      %s33 = int_to_ptr.vmem [resolvable:$true] %s32
      %38 = dma.hbm_to_vmem [thread:$0]  %s31, 2048, %s33, [#allocation6], 128, 128, 8
    $region9: #{tpu_custom_call.1} parent=1 // pred_fallthru
      _
    // Predicated region
    $region10: #{tpu_custom_call.1} parent=1 // pred_check
      _
    $region11: #{tpu_custom_call.1} parent=1 // pred_check_branch
      %40 = sbr.rel (0) target = $region13
    $region12: #{tpu_custom_call.1} parent=1 // pred_region
      _
    $region13: #{tpu_custom_call.1} parent=1 // pred_fallthru
      _
    // Predicated region
    $region14: #{tpu_custom_call.1} parent=1 // pred_check
      _
    $region15: #{tpu_custom_call.1} parent=1 // pred_check_branch
      %42 = sbr.rel (0) target = $region17
    $region16: #{tpu_custom_call.1} parent=1 // pred_region
      %44 = vsyncadd [#allocation6], 0
      %s45 = sshll.u32 %s3, 4
      %s46 = int_to_ptr.hbm [resolvable:$true] %s45
      %s47 = sshll.u32 [#allocation7], 4
      %s48 = int_to_ptr.vmem [resolvable:$true] %s47
      %53 = dma.hbm_to_vmem [thread:$0]  %s46, 2048, %s48, [#allocation6], 128, 128, 8
    $region17: #{tpu_custom_call.1} parent=1 // pred_fallthru
      _
    // Predicated region
    $region18: #{tpu_custom_call.1} parent=1 // pred_check
      _
    $region19: #{tpu_custom_call.1} parent=1 // pred_check_branch
      %55 = sbr.rel (0) target = $region21
    $region20: #{tpu_custom_call.1} parent=1 // pred_region
      _
    $region21: #{tpu_custom_call.1} parent=1 // pred_fallthru
      _
    // Predicated region
    $region22: #{tpu_custom_call.1} parent=1 // pred_check
      _
    $region23: #{tpu_custom_call.1} parent=1 // pred_check_branch
      %57 = sbr.rel (0) target = $region25
    $region24: #{tpu_custom_call.1} parent=1 // pred_region
      %59 = dma.done [#allocation3], 256
    $region25: #{tpu_custom_call.1} parent=1 // pred_fallthru
      _
    // Predicated region
    $region26: #{tpu_custom_call.1} parent=1 // pred_check
      _
    $region27: #{tpu_custom_call.1} parent=1 // pred_check_branch
      %61 = sbr.rel (0) target = $region29
    $region28: #{tpu_custom_call.1} parent=1 // pred_region
      %63 = dma.done [#allocation6], 2048
    $region29: #{tpu_custom_call.1} parent=1 // pred_fallthru
      _
    // Predicated region
    $region30: #{tpu_custom_call.1} parent=1 // pred_check
      _
    $region31: #{tpu_custom_call.1} parent=1 // pred_check_branch
      %65 = sbr.rel (0) target = $region33
    $region32: #{tpu_custom_call.1} parent=1 // pred_region
      %67 = dma.done [#allocation6], 2048
    $region33: #{tpu_custom_call.1} parent=1 // pred_fallthru
      _
    %v68 = vld [vmem:[#allocation2] sm:$0xff]
    %v69 = vld [vmem:[#allocation2 + $0x8] sm:$0xff]
    %v70 = vld [vmem:[#allocation5] sm:$0xff]
    %v71 = vld [vmem:[#allocation5 + $0x8] sm:$0xff]
    %v72 = vld [vmem:[#allocation5 + $0x10] sm:$0xff]
    %v73 = vld [vmem:[#allocation5 + $0x18] sm:$0xff]
    %v74 = vld [vmem:[#allocation5 + $0x20] sm:$0xff]
    %v75 = vld [vmem:[#allocation5 + $0x28] sm:$0xff]
    %v76 = vld [vmem:[#allocation5 + $0x30] sm:$0xff]
    %v77 = vld [vmem:[#allocation5 + $0x38] sm:$0xff]
    %v78 = vld [vmem:[#allocation5 + $0x40] sm:$0xff]
    %v79 = vld [vmem:[#allocation5 + $0x48] sm:$0xff]
    %v80 = vld [vmem:[#allocation5 + $0x50] sm:$0xff]
    %v81 = vld [vmem:[#allocation5 + $0x58] sm:$0xff]
    %v82 = vld [vmem:[#allocation5 + $0x60] sm:$0xff]
    %v83 = vld [vmem:[#allocation5 + $0x68] sm:$0xff]
    %v84 = vld [vmem:[#allocation5 + $0x70] sm:$0xff]
    %v85 = vld [vmem:[#allocation5 + $0x78] sm:$0xff]
    %v86 = vld [vmem:[%s2] sm:$0x1]
    %v88 = vperm.slane %v86, 0
    %90 = vmatpush.msra.mxu0 %v85
    %91 = vmatpush.msra.mxu0 %v84
    %92 = vmatpush.msra.mxu0 %v83
    %93 = vmatpush.msra.mxu0 %v82
    %94 = vmatpush.msra.mxu0 %v81
    %95 = vmatpush.msra.mxu0 %v80
    %96 = vmatpush.msra.mxu0 %v79
    %97 = vmatpush.msra.mxu0 %v78
    %98 = vmatpush.msra.mxu0 %v77
    %99 = vmatpush.msra.mxu0 %v76
    %100 = vmatpush.msra.mxu0 %v75
    %101 = vmatpush.msra.mxu0 %v74
    %102 = vmatpush.msra.mxu0 %v73
    %103 = vmatpush.msra.mxu0 %v72
    %104 = vmatpush.msra.mxu0 %v71
    %105 = vmatpush.msra.mxu0 %v70
    %106 = vmatmul.f32.gmra.mxu0 %v68
    %v107 = vpop.f32.mrf.mxu0
    %v108 = vadd.f32 %v88, %v107
    %109 = vmatmul.f32.gmra.mxu0 %v69
    %v110 = vpop.f32.mrf.mxu0
    %v111 = vadd.f32 %v88, %v110
    %112 = vdwg.mxu0
    %v113 = vmul.f32 %v108, 0.5
    %v114 = vmul.f32 %v111, 0.5
    %v115 = vmul.f32 %v108, 0.70710677
    %v116 = vmul.f32 %v111, 0.70710677
    %v117 = vmul.f32 %v115, %v115
    %v118 = vmin.f32 16.0, %v117
    %v119 = vmul.f32 %v118, 2.1237322e-06
    %v120 = vadd.f32 %v119, 0.00028619796
    %v121 = vmul.f32 %v118, %v120
    %v122 = vadd.f32 %v121, 0.0036580483
    %v123 = vmul.f32 %v118, %v122
    %v124 = vadd.f32 %v123, 0.05243302
    %v125 = vmul.f32 %v118, %v124
    %v126 = vadd.f32 %v125, 0.18741608
    %v127 = vmul.f32 %v118, %v126
    %v128 = vadd.f32 %v127, 1.1283791
    %v129 = vmul.f32 %v115, %v128
    %v130 = vmul.f32 %v118, 3.8918573e-05
    %v131 = vadd.f32 %v130, 0.001143296
    %v132 = vmul.f32 %v118, %v131
    %v133 = vadd.f32 %v132, 0.014752088
    %v134 = vmul.f32 %v118, %v133
    %v135 = vadd.f32 %v134, 0.112945676
    %v136 = vmul.f32 %v118, %v135
    %v137 = vadd.f32 %v136, 0.4994258
    %v138 = vmul.f32 %v118, %v137
    %v139 = vadd.f32 %v138, 1.0
    %v140 = vrcp.pop %v139
    %v141 = vmul.f32 %v139, %v140
    %v142 = vsub.f32 1.0, %v141
    %v143 = vmul.f32 %v140, %v142
    %v144 = vadd.f32 %v140, %v143
    %vm145 = vweird.f32 %v139
    %vm146 = vweird.f32 %v140
    %vm147 = vmor %vm145, %vm146
    %v148 = vsel %vm147, %v140, %v144
    %v149 = vand.u32 2147483647, %v139
    %vm150 = vcmp.eq.f32.partialorder %v149, 8.507059e+37
    %v151 = vand.u32 %v139, 2147483648
    %v152 = vor.u32 1.1754944e-38, %v151
    %v153 = vsel %vm150, %v152, %v148
    %v154 = vmul.f32 %v129, %v153
    %v155 = vmin.f32 %v154, 1.0
    %v156 = vmax.f32 %v155, -1.0
    %v157 = vmul.f32 %v116, %v116
    %v158 = vmin.f32 16.0, %v157
    %v159 = vmul.f32 %v158, 2.1237322e-06
    %v160 = vadd.f32 %v159, 0.00028619796
    %v161 = vmul.f32 %v158, %v160
    %v162 = vadd.f32 %v161, 0.0036580483
    %v163 = vmul.f32 %v158, %v162
    %v164 = vadd.f32 %v163, 0.05243302
    %v165 = vmul.f32 %v158, %v164
    %v166 = vadd.f32 %v165, 0.18741608
    %v167 = vmul.f32 %v158, %v166
    %v168 = vadd.f32 %v167, 1.1283791
    %v169 = vmul.f32 %v116, %v168
    %v170 = vmul.f32 %v158, 3.8918573e-05
    %v171 = vadd.f32 %v170, 0.001143296
    %v172 = vmul.f32 %v158, %v171
    %v173 = vadd.f32 %v172, 0.014752088
    %v174 = vmul.f32 %v158, %v173
    %v175 = vadd.f32 %v174, 0.112945676
    %v176 = vmul.f32 %v158, %v175
    %v177 = vadd.f32 %v176, 0.4994258
    %v178 = vmul.f32 %v158, %v177
    %v179 = vadd.f32 %v178, 1.0
    %v180 = vrcp.pop %v179
    %v181 = vmul.f32 %v179, %v180
    %v182 = vsub.f32 1.0, %v181
    %v183 = vmul.f32 %v180, %v182
    %v184 = vadd.f32 %v180, %v183
    %vm185 = vweird.f32 %v179
    %vm186 = vweird.f32 %v180
    %vm187 = vmor %vm185, %vm186
    %v188 = vsel %vm187, %v180, %v184
    %v189 = vand.u32 2147483647, %v179
    %vm190 = vcmp.eq.f32.partialorder %v189, 8.507059e+37
    %v191 = vand.u32 %v179, 2147483648
    %v192 = vor.u32 1.1754944e-38, %v191
    %v193 = vsel %vm190, %v192, %v188
    %v194 = vmul.f32 %v169, %v193
    %v195 = vmin.f32 %v194, 1.0
    %v196 = vmax.f32 %v195, -1.0
    %v197 = vadd.f32 %v156, 1.0
    %v198 = vadd.f32 %v196, 1.0
    %v199 = vmul.f32 %v113, %v197
    %v200 = vmul.f32 %v114, %v198
    %v201 = vld [vmem:[#allocation7] sm:$0xff]
    %v202 = vld [vmem:[#allocation7 + $0x8] sm:$0xff]
    %v203 = vld [vmem:[#allocation7 + $0x10] sm:$0xff]
    %v204 = vld [vmem:[#allocation7 + $0x18] sm:$0xff]
    %v205 = vld [vmem:[#allocation7 + $0x20] sm:$0xff]
    %v206 = vld [vmem:[#allocation7 + $0x28] sm:$0xff]
    %v207 = vld [vmem:[#allocation7 + $0x30] sm:$0xff]
    %v208 = vld [vmem:[#allocation7 + $0x38] sm:$0xff]
    %v209 = vld [vmem:[#allocation7 + $0x40] sm:$0xff]
    %v210 = vld [vmem:[#allocation7 + $0x48] sm:$0xff]
    %v211 = vld [vmem:[#allocation7 + $0x50] sm:$0xff]
    %v212 = vld [vmem:[#allocation7 + $0x58] sm:$0xff]
    %v213 = vld [vmem:[#allocation7 + $0x60] sm:$0xff]
    %v214 = vld [vmem:[#allocation7 + $0x68] sm:$0xff]
    %v215 = vld [vmem:[#allocation7 + $0x70] sm:$0xff]
    %v216 = vld [vmem:[#allocation7 + $0x78] sm:$0xff]
    %v217 = vld [vmem:[%s4] sm:$0x1]
    %v219 = vperm.slane %v217, 0
    %221 = vmatpush.msra.mxu0 %v216
    %222 = vmatpush.msra.mxu0 %v215
    %223 = vmatpush.msra.mxu0 %v214
    %224 = vmatpush.msra.mxu0 %v213
    %225 = vmatpush.msra.mxu0 %v212
    %226 = vmatpush.msra.mxu0 %v211
    %227 = vmatpush.msra.mxu0 %v210
    %228 = vmatpush.msra.mxu0 %v209
    %229 = vmatpush.msra.mxu0 %v208
    %230 = vmatpush.msra.mxu0 %v207
    %231 = vmatpush.msra.mxu0 %v206
    %232 = vmatpush.msra.mxu0 %v205
    %233 = vmatpush.msra.mxu0 %v204
    %234 = vmatpush.msra.mxu0 %v203
    %235 = vmatpush.msra.mxu0 %v202
    %236 = vmatpush.msra.mxu0 %v201
    %237 = vmatmul.f32.gmra.mxu0 %v199
    %v238 = vpop.f32.mrf.mxu0
    %v239 = vadd.f32 %v219, %v238
    %240 = vmatmul.f32.gmra.mxu0 %v200
    %v241 = vpop.f32.mrf.mxu0
    %v242 = vadd.f32 %v219, %v241
    %243 = vdwg.mxu0
    %244 = vst [vmem:[#allocation8] sm:$0xff] %v239
    %245 = vst [vmem:[#allocation8 + $0x8] sm:$0xff] %v242
    // Predicated region
    $region34: #{tpu_custom_call.1} parent=1 // pred_check
      _
    $region35: #{tpu_custom_call.1} parent=1 // pred_check_branch
      %247 = sbr.rel (0) target = $region37
    $region36: #{tpu_custom_call.1} parent=1 // pred_region
      %249 = vsyncadd [#allocation4], 0
      %s250 = sshll.u32 [#allocation8], 4
      %s251 = int_to_ptr.vmem [resolvable:$true] %s250
      %s252 = sshll.u32 %s5, 4
      %s253 = int_to_ptr.hbm [resolvable:$true] %s252
      %258 = dma.vmem_to_hbm [thread:$0]  %s251, 256, %s253, [#allocation4], 128, 128, 8
    $region37: #{tpu_custom_call.1} parent=1 // pred_fallthru
      _
    // Predicated region
    $region38: #{tpu_custom_call.1} parent=1 // pred_check
      _
    $region39: #{tpu_custom_call.1} parent=1 // pred_check_branch
      %260 = sbr.rel (0) target = $region41
    $region40: #{tpu_custom_call.1} parent=1 // pred_region
      %262 = dma.done [#allocation4], 256
    $region41: #{tpu_custom_call.1} parent=1 // pred_fallthru
      _
    %263 = vsyncpa [#allocation3], 1
    %264 = vsyncpa [#allocation6], 1
    %265 = vsyncpa [#allocation4], 1

</llo_original>
